<compile_context>
chip_gen: v5e
topology: v5e:2x2
jax: 0.10.0
libtpu: 0.0.40
codegen_flags: <defaults>
</compile_context>

<pallas_src>
import functools

import jax
import jax.numpy as jnp
from jax.experimental import pallas as pl
from jax.experimental.pallas import tpu as pltpu


def _silu(x):
    # SiLU / swish: x * sigmoid(x)
    return x * jax.nn.sigmoid(x)


def _round_up(x, m):
    return ((x + m - 1) // m) * m


def _mlp_kernel(n_layers, *refs):
    # refs layout: xT_ref, (w0, b0, w1, b1, ..., w_{L-1}, b_{L-1}), out_ref
    x_ref = refs[0]
    out_ref = refs[-1]
    param_refs = refs[1:-1]

    h = x_ref[...].astype(jnp.float32)            # (F_in, tile_b)
    for li in range(n_layers):
        w = param_refs[2 * li][...]               # (out, in)
        b = param_refs[2 * li + 1][...]           # (out, 1)
        k = w.shape[1]
        if li == 0 and k <= 8:
            # Tiny contraction (K = F_in): broadcast FMAs on the VPU, keeping
            # the MXU free and skipping a mostly-pipeline-fill matmul pass.
            acc = jnp.broadcast_to(b.astype(jnp.float32), (w.shape[0], h.shape[1]))
            for f in range(k):
                acc = acc + w[:, f:f + 1].astype(jnp.float32) * h[f:f + 1, :]
            h = acc
        else:
            # Weight dtype (static at trace time) decides the MXU operand
            # precision; accumulation is always f32.
            if w.dtype == jnp.bfloat16:
                rhs = h.astype(jnp.bfloat16)
            else:
                rhs = h
            h = jnp.dot(w, rhs, preferred_element_type=jnp.float32)
            h = h + b.astype(jnp.float32)
        if li < n_layers - 1:                      # activation on all but last layer
            h = _silu(h)                           # elementwise math stays f32
    out_ref[...] = h.astype(out_ref.dtype)


def _choose_tile_b(n, requested_tile_b):
    """Pick a lane-dense batch tile (multiple of 128)."""
    n128 = _round_up(max(n, 1), 128)
    tb = max(128, (requested_tile_b // 128) * 128)
    tb = min(tb, n128)
    # v7x megacore: if the batch spans >= 2 lane tiles, make sure the grid has
    # at least 2 steps so the "parallel" axis shards across both TensorCores.
    if n128 >= 2 * 128:
        tb = min(tb, _round_up((n128 + 1) // 2, 128))
    return tb


@functools.partial(jax.jit, static_argnames=("tile_b", "use_bf16"))
def _dnn_forward_jit(x, weights, biases, *, tile_b, use_bf16):
    n_layers = len(weights)
    N, f_in = x.shape
    out_dim = weights[-1].shape[0]

    tb = _choose_tile_b(N, tile_b)
    n_pad = _round_up(N, tb)

    # Coordinate-major, lane-dense input slab (pad + transpose fuse under jit).
    x_t = jnp.pad(x.T.astype(jnp.float32), ((0, 0), (0, n_pad - N)))

    in_specs = [pl.BlockSpec((f_in, tb), lambda i: (0, i))]
    operands = [x_t]
    for li, (w, b) in enumerate(zip(weights, biases)):
        # bf16 only for the hidden matmul weights: layer 0 runs on the VPU in
        # f32 (keep input-coordinate precision), last layer kept f32 for the
        # output precision.
        if use_bf16 and 0 < li < n_layers - 1:
            w_op = w.astype(jnp.bfloat16)
        else:
            w_op = w.astype(jnp.float32)
        in_specs.append(pl.BlockSpec(w.shape, lambda i: (0, 0)))
        in_specs.append(pl.BlockSpec(b.shape, lambda i: (0, 0)))
        operands.append(w_op)
        operands.append(b.astype(jnp.float32))

    out_spec = pl.BlockSpec((out_dim, tb), lambda i: (0, i))

    kernel = functools.partial(_mlp_kernel, n_layers)

    out = pl.pallas_call(
        kernel,
        out_shape=jax.ShapeDtypeStruct((out_dim, n_pad), jnp.float32),
        grid_spec=pltpu.PrefetchScalarGridSpec(
            num_scalar_prefetch=0,
            grid=(n_pad // tb,),
            in_specs=in_specs,
            out_specs=out_spec,
        ),
        compiler_params=pltpu.CompilerParams(
            dimension_semantics=("parallel",),   # megacore-shardable on v7x
        ),
    )(*operands)

    # One transpose of the slab, then cheap column views (fuse under jit).
    out_nt = out[:, :N].T                         # (N, out_dim)
    u = out_nt[:, 0:1]
    v = out_nt[:, 1:2]
    p = out_nt[:, 2:3]
    return u, v, p


def dnn_forward(x, weights, biases, *, tile_b=2048, use_bf16=True):
    """Run the full MLP in a single Pallas kernel, batch tiled on the lane axis.

    x:        (N, F_in) float32
    weights:  list of (out_i, in_i) float32  (torch nn.Linear layout)
    biases:   list of (out_i, 1)  float32
    returns:  u, v, p  each (N, 1) float32
    """
    return _dnn_forward_jit(x, tuple(weights), tuple(biases),
                            tile_b=int(tile_b), use_bf16=bool(use_bf16))


def init_params(layers, key):
    """Deterministic init mimicking torch.nn.Linear default (uniform ±1/sqrt(fan_in))."""
    weights, biases = [], []
    for i in range(len(layers) - 1):
        fan_in, fan_out = layers[i], layers[i + 1]
        key, kw, kb = jax.random.split(key, 3)
        bound = 1.0 / (fan_in ** 0.5)
        # torch layout: weight (out_features, in_features), bias kept as (out, 1)
        w = jax.random.uniform(kw, (fan_out, fan_in), jnp.float32, -bound, bound)
        b = jax.random.uniform(kb, (fan_out, 1), jnp.float32, -bound, bound)
        weights.append(w)
        biases.append(b)
    return weights, biases


def reference_forward(x, weights, biases):
    h = x
    for i, (w, b) in enumerate(zip(weights, biases)):
        h = h @ w.T + b[:, 0]
        if i < len(weights) - 1:
            h = _silu(h)
    return h[:, 0:1], h[:, 1:2], h[:, 2:3]


if __name__ == "__main__":
    # PINN-style layer spec: 2 input coords -> hidden -> 3 outputs (u, v, p)
    layers = [2, 32, 32, 32, 3]

    key = jax.random.PRNGKey(0)
    weights, biases = init_params(layers, key)

    # --- small-shape correctness run (pure f32 path, batch not a tile multiple) ---
    key, kx = jax.random.split(key)
    batch = 16
    x = jax.random.normal(kx, (batch, layers[0]), jnp.float32)

    u, v, p = dnn_forward(x, weights, biases, use_bf16=False)
    jax.block_until_ready((u, v, p))

    u_ref, v_ref, p_ref = reference_forward(x, weights, biases)
    assert u.shape == (batch, 1) and v.shape == (batch, 1) and p.shape == (batch, 1)
    assert jnp.allclose(u, u_ref, atol=1e-4), "u mismatch"
    assert jnp.allclose(v, v_ref, atol=1e-4), "v mismatch"
    assert jnp.allclose(p, p_ref, atol=1e-4), "p mismatch"

    # --- larger batch: multi-step grid (>=2 steps for v7x) + default bf16 hidden layers ---
    key, kx2 = jax.random.split(key)
    batch2 = 1000                                   # not a multiple of 128
    x2 = jax.random.normal(kx2, (batch2, layers[0]), jnp.float32)
    u2, v2, p2 = dnn_forward(x2, weights, biases)   # defaults: tile_b=2048, use_bf16=True
    jax.block_until_ready((u2, v2, p2))

    u2r, v2r, p2r = reference_forward(x2, weights, biases)
    assert u2.shape == (batch2, 1) and v2.shape == (batch2, 1) and p2.shape == (batch2, 1)
    assert jnp.allclose(u2, u2r, atol=5e-2, rtol=5e-2), "u bf16 mismatch"
    assert jnp.allclose(v2, v2r, atol=5e-2, rtol=5e-2), "v bf16 mismatch"
    assert jnp.allclose(p2, p2r, atol=5e-2, rtol=5e-2), "p bf16 mismatch"

    print("KERNEL_OK")
</pallas_src>

<mosaic_0001>
module attributes {stable_mosaic.version = 11 : i64} {
  func.func @_mlp_kernel(%arg0: i32, %arg1: memref<2x128xf32, #tpu.memory_space<vmem>>, %arg2: memref<32x2xf32, #tpu.memory_space<vmem>>, %arg3: memref<32x1xf32, #tpu.memory_space<vmem>>, %arg4: memref<32x32xf32, #tpu.memory_space<vmem>>, %arg5: memref<32x1xf32, #tpu.memory_space<vmem>>, %arg6: memref<32x32xf32, #tpu.memory_space<vmem>>, %arg7: memref<32x1xf32, #tpu.memory_space<vmem>>, %arg8: memref<3x32xf32, #tpu.memory_space<vmem>>, %arg9: memref<3x1xf32, #tpu.memory_space<vmem>>, %arg10: memref<3x128xf32, #tpu.memory_space<vmem>>) attributes {dimension_semantics = [#tpu.dimension_semantics<parallel>], iteration_bounds = array<i64: 1>, scalar_prefetch = 0 : i64, scratch_operands = 0 : i64, tpu.core_type = #tpu.core_type<tc>, window_params = [{transform_indices = @transform_0, window_bounds = array<i64: 2, 128>}, {pipeline_mode = #tpu.pipeline_mode<synchronous>, transform_indices = @transform_1, window_bounds = array<i64: 32, 2>}, {pipeline_mode = #tpu.pipeline_mode<synchronous>, transform_indices = @transform_2, window_bounds = array<i64: 32, 1>}, {pipeline_mode = #tpu.pipeline_mode<synchronous>, transform_indices = @transform_3, window_bounds = array<i64: 32, 32>}, {pipeline_mode = #tpu.pipeline_mode<synchronous>, transform_indices = @transform_4, window_bounds = array<i64: 32, 1>}, {pipeline_mode = #tpu.pipeline_mode<synchronous>, transform_indices = @transform_5, window_bounds = array<i64: 32, 32>}, {pipeline_mode = #tpu.pipeline_mode<synchronous>, transform_indices = @transform_6, window_bounds = array<i64: 32, 1>}, {pipeline_mode = #tpu.pipeline_mode<synchronous>, transform_indices = @transform_7, window_bounds = array<i64: 3, 32>}, {pipeline_mode = #tpu.pipeline_mode<synchronous>, transform_indices = @transform_8, window_bounds = array<i64: 3, 1>}, {transform_indices = @transform_9, window_bounds = array<i64: 3, 128>}]} {
    %c0 = arith.constant 0 : index
    %c0_0 = arith.constant 0 : index
    %0 = vector.load %arg1[%c0, %c0_0] : memref<2x128xf32, #tpu.memory_space<vmem>>, vector<2x128xf32>
    %c0_1 = arith.constant 0 : index
    %c0_2 = arith.constant 0 : index
    %1 = vector.load %arg2[%c0_1, %c0_2] : memref<32x2xf32, #tpu.memory_space<vmem>>, vector<32x2xf32>
    %c0_3 = arith.constant 0 : index
    %c0_4 = arith.constant 0 : index
    %2 = vector.load %arg3[%c0_3, %c0_4] : memref<32x1xf32, #tpu.memory_space<vmem>>, vector<32x1xf32>
    %3 = vector.shape_cast %2 : vector<32x1xf32> to vector<32x1xf32>
    %4 = vector.broadcast %3 : vector<32x1xf32> to vector<32x128xf32>
    %5 = vector.extract_strided_slice %1 {offsets = [0, 0], sizes = [32, 1], strides = [1, 1]} : vector<32x2xf32> to vector<32x1xf32>
    %6 = vector.extract_strided_slice %0 {offsets = [0, 0], sizes = [1, 128], strides = [1, 1]} : vector<2x128xf32> to vector<1x128xf32>
    %7 = vector.broadcast %5 : vector<32x1xf32> to vector<32x128xf32>
    %8 = vector.broadcast %6 : vector<1x128xf32> to vector<32x128xf32>
    %9 = arith.mulf %7, %8 : vector<32x128xf32>
    %10 = arith.addf %4, %9 : vector<32x128xf32>
    %11 = vector.extract_strided_slice %1 {offsets = [0, 1], sizes = [32, 1], strides = [1, 1]} : vector<32x2xf32> to vector<32x1xf32>
    %12 = vector.extract_strided_slice %0 {offsets = [1, 0], sizes = [1, 128], strides = [1, 1]} : vector<2x128xf32> to vector<1x128xf32>
    %13 = vector.broadcast %11 : vector<32x1xf32> to vector<32x128xf32>
    %14 = vector.broadcast %12 : vector<1x128xf32> to vector<32x128xf32>
    %15 = arith.mulf %13, %14 : vector<32x128xf32>
    %16 = arith.addf %10, %15 : vector<32x128xf32>
    %17 = arith.negf %16 : vector<32x128xf32>
    %18 = math.exp %17 : vector<32x128xf32>
    %cst = arith.constant 1.000000e+00 : f32
    %19 = vector.broadcast %cst : f32 to vector<32x128xf32>
    %20 = arith.addf %19, %18 : vector<32x128xf32>
    %21 = arith.divf %19, %20 : vector<32x128xf32>
    %22 = arith.mulf %16, %21 : vector<32x128xf32>
    %c0_5 = arith.constant 0 : index
    %c0_6 = arith.constant 0 : index
    %23 = vector.load %arg4[%c0_5, %c0_6] : memref<32x32xf32, #tpu.memory_space<vmem>>, vector<32x32xf32>
    %c0_7 = arith.constant 0 : index
    %c0_8 = arith.constant 0 : index
    %24 = vector.load %arg5[%c0_7, %c0_8] : memref<32x1xf32, #tpu.memory_space<vmem>>, vector<32x1xf32>
    %cst_9 = arith.constant dense<0.000000e+00> : vector<32x128xf32>
    %25 = tpu.matmul %23, %22, %cst_9 {dimension_numbers = #tpu.dot_dimension_numbers<[1], [0], [0], [1], [0, 0, 1, 1], [], []>} : vector<32x32xf32>, vector<32x128xf32>, vector<32x128xf32> -> vector<32x128xf32>
    %26 = vector.broadcast %24 : vector<32x1xf32> to vector<32x128xf32>
    %27 = arith.addf %25, %26 : vector<32x128xf32>
    %28 = arith.negf %27 : vector<32x128xf32>
    %29 = math.exp %28 : vector<32x128xf32>
    %cst_10 = arith.constant 1.000000e+00 : f32
    %30 = vector.broadcast %cst_10 : f32 to vector<32x128xf32>
    %31 = arith.addf %30, %29 : vector<32x128xf32>
    %32 = arith.divf %30, %31 : vector<32x128xf32>
    %33 = arith.mulf %27, %32 : vector<32x128xf32>
    %c0_11 = arith.constant 0 : index
    %c0_12 = arith.constant 0 : index
    %34 = vector.load %arg6[%c0_11, %c0_12] : memref<32x32xf32, #tpu.memory_space<vmem>>, vector<32x32xf32>
    %c0_13 = arith.constant 0 : index
    %c0_14 = arith.constant 0 : index
    %35 = vector.load %arg7[%c0_13, %c0_14] : memref<32x1xf32, #tpu.memory_space<vmem>>, vector<32x1xf32>
    %cst_15 = arith.constant dense<0.000000e+00> : vector<32x128xf32>
    %36 = tpu.matmul %34, %33, %cst_15 {dimension_numbers = #tpu.dot_dimension_numbers<[1], [0], [0], [1], [0, 0, 1, 1], [], []>} : vector<32x32xf32>, vector<32x128xf32>, vector<32x128xf32> -> vector<32x128xf32>
    %37 = vector.broadcast %35 : vector<32x1xf32> to vector<32x128xf32>
    %38 = arith.addf %36, %37 : vector<32x128xf32>
    %39 = arith.negf %38 : vector<32x128xf32>
    %40 = math.exp %39 : vector<32x128xf32>
    %cst_16 = arith.constant 1.000000e+00 : f32
    %41 = vector.broadcast %cst_16 : f32 to vector<32x128xf32>
    %42 = arith.addf %41, %40 : vector<32x128xf32>
    %43 = arith.divf %41, %42 : vector<32x128xf32>
    %44 = arith.mulf %38, %43 : vector<32x128xf32>
    %c0_17 = arith.constant 0 : index
    %c0_18 = arith.constant 0 : index
    %45 = vector.load %arg8[%c0_17, %c0_18] : memref<3x32xf32, #tpu.memory_space<vmem>>, vector<3x32xf32>
    %c0_19 = arith.constant 0 : index
    %c0_20 = arith.constant 0 : index
    %46 = vector.load %arg9[%c0_19, %c0_20] : memref<3x1xf32, #tpu.memory_space<vmem>>, vector<3x1xf32>
    %cst_21 = arith.constant dense<0.000000e+00> : vector<3x128xf32>
    %47 = tpu.matmul %45, %44, %cst_21 {dimension_numbers = #tpu.dot_dimension_numbers<[1], [0], [0], [1], [0, 0, 1, 1], [], []>} : vector<3x32xf32>, vector<32x128xf32>, vector<3x128xf32> -> vector<3x128xf32>
    %48 = vector.broadcast %46 : vector<3x1xf32> to vector<3x128xf32>
    %49 = arith.addf %47, %48 : vector<3x128xf32>
    %c0_22 = arith.constant 0 : index
    %c0_23 = arith.constant 0 : index
    %50 = vector.load %arg10[%c0_22, %c0_23] : memref<3x128xf32, #tpu.memory_space<vmem>>, vector<3x128xf32>
    tpu.vector_store %arg10[%c0_22, %c0_23], %49 {strides = array<i32>} : memref<3x128xf32, #tpu.memory_space<vmem>>, vector<3x128xf32>,
    return
  }
  func.func @transform_0(%arg0: i32) -> (i32, i32) {
    %c0_i32 = arith.constant 0 : i32
    %c0_i32_0 = arith.constant 0 : i32
    return %c0_i32, %arg0 : i32, i32
  }
  func.func @transform_1(%arg0: i32) -> (i32, i32) {
    %c0_i32 = arith.constant 0 : i32
    %c0_i32_0 = arith.constant 0 : i32
    %c0_i32_1 = arith.constant 0 : i32
    return %c0_i32, %c0_i32_0 : i32, i32
  }
  func.func @transform_2(%arg0: i32) -> (i32, i32) {
    %c0_i32 = arith.constant 0 : i32
    %c0_i32_0 = arith.constant 0 : i32
    %c0_i32_1 = arith.constant 0 : i32
    return %c0_i32, %c0_i32_0 : i32, i32
  }
  func.func @transform_3(%arg0: i32) -> (i32, i32) {
    %c0_i32 = arith.constant 0 : i32
    %c0_i32_0 = arith.constant 0 : i32
    %c0_i32_1 = arith.constant 0 : i32
    return %c0_i32, %c0_i32_0 : i32, i32
  }
  func.func @transform_4(%arg0: i32) -> (i32, i32) {
    %c0_i32 = arith.constant 0 : i32
    %c0_i32_0 = arith.constant 0 : i32
    %c0_i32_1 = arith.constant 0 : i32
    return %c0_i32, %c0_i32_0 : i32, i32
  }
  func.func @transform_5(%arg0: i32) -> (i32, i32) {
    %c0_i32 = arith.constant 0 : i32
    %c0_i32_0 = arith.constant 0 : i32
    %c0_i32_1 = arith.constant 0 : i32
    return %c0_i32, %c0_i32_0 : i32, i32
  }
  func.func @transform_6(%arg0: i32) -> (i32, i32) {
    %c0_i32 = arith.constant 0 : i32
    %c0_i32_0 = arith.constant 0 : i32
    %c0_i32_1 = arith.constant 0 : i32
    return %c0_i32, %c0_i32_0 : i32, i32
  }
  func.func @transform_7(%arg0: i32) -> (i32, i32) {
    %c0_i32 = arith.constant 0 : i32
    %c0_i32_0 = arith.constant 0 : i32
    %c0_i32_1 = arith.constant 0 : i32
    return %c0_i32, %c0_i32_0 : i32, i32
  }
  func.func @transform_8(%arg0: i32) -> (i32, i32) {
    %c0_i32 = arith.constant 0 : i32
    %c0_i32_0 = arith.constant 0 : i32
    %c0_i32_1 = arith.constant 0 : i32
    return %c0_i32, %c0_i32_0 : i32, i32
  }
  func.func @transform_9(%arg0: i32) -> (i32, i32) {
    %c0_i32 = arith.constant 0 : i32
    %c0_i32_0 = arith.constant 0 : i32
    return %c0_i32, %arg0 : i32, i32
  }
}

</mosaic_0001>

<llo_original>
// kernel: _dnn_forward_jit.1
$region0: #{_dnn_forward_jit.1}
  #allocation0 [shape = 'u32[]', space=smem, size = 0x4, offset = 0x4, fixed_abs, tag = 'smem constant byte address 0x4 - core index']
  #allocation1 [shape = 'u32[72,128]{1,0:T(1,128)}', space=vmem, size = 0x9000, scoped, tag = 'internal scratch']
  %s0 = inlined_call_operand.vmem [shape: f32[2,128], index: 0, kind: input, shape index: {}]
  %s1 = inlined_call_operand.vmem [shape: f32[32,2], index: 1, kind: input, shape index: {}]
  %s2 = inlined_call_operand.vmem [shape: f32[32,1], index: 2, kind: input, shape index: {}]
  %s3 = inlined_call_operand.vmem [shape: f32[32,32], index: 3, kind: input, shape index: {}]
  %s4 = inlined_call_operand.vmem [shape: f32[32,1], index: 4, kind: input, shape index: {}]
  %s5 = inlined_call_operand.vmem [shape: f32[32,32], index: 5, kind: input, shape index: {}]
  %s6 = inlined_call_operand.vmem [shape: f32[32,1], index: 6, kind: input, shape index: {}]
  %s7 = inlined_call_operand.vmem [shape: f32[3,32], index: 7, kind: input, shape index: {}]
  %s8 = inlined_call_operand.vmem [shape: f32[3,1], index: 8, kind: input, shape index: {}]
  %s9 = inlined_call_operand.vmem [shape: f32[3,128], index: 9, kind: output, shape index: {}]
  %s10 = sld [smem:[#allocation0]]
  $region46: #{_dnn_forward_jit.1} parent=0
    _
  %s12 = ssub.s32 1, %s10
  %s13 = scalar_select 0, %s12, %s10
  // Predicated region
  $region2: #{_dnn_forward_jit.1} parent=0 // pred_check
    _
  $region3: #{_dnn_forward_jit.1} parent=0 // pred_check_branch
    %15 = sbr.rel (0) target = $region5
  $region4: #{_dnn_forward_jit.1} parent=0 // pred_region
    _
  $region5: #{_dnn_forward_jit.1} parent=0 // pred_fallthru
    _
  // Predicated region
  $region6: #{_dnn_forward_jit.1} parent=0 // pred_check
    _
  $region7: #{_dnn_forward_jit.1} parent=0 // pred_check_branch
    %17 = sbr.rel (0) target = $region9
  $region8: #{_dnn_forward_jit.1} parent=0 // pred_region
    _
  $region9: #{_dnn_forward_jit.1} parent=0 // pred_fallthru
    _
  // Predicated region
  $region10: #{_dnn_forward_jit.1} parent=0 // pred_check
    _
  $region11: #{_dnn_forward_jit.1} parent=0 // pred_check_branch
    %19 = sbr.rel (0) target = $region13
  $region12: #{_dnn_forward_jit.1} parent=0 // pred_region
    _
  $region13: #{_dnn_forward_jit.1} parent=0 // pred_fallthru
    _
  // Predicated region
  $region14: #{_dnn_forward_jit.1} parent=0 // pred_check
    _
  $region15: #{_dnn_forward_jit.1} parent=0 // pred_check_branch
    %21 = sbr.rel (0) target = $region17
  $region16: #{_dnn_forward_jit.1} parent=0 // pred_region
    _
  $region17: #{_dnn_forward_jit.1} parent=0 // pred_fallthru
    _
  // Predicated region
  $region18: #{_dnn_forward_jit.1} parent=0 // pred_check
    _
  $region19: #{_dnn_forward_jit.1} parent=0 // pred_check_branch
    %23 = sbr.rel (0) target = $region21
  $region20: #{_dnn_forward_jit.1} parent=0 // pred_region
    _
  $region21: #{_dnn_forward_jit.1} parent=0 // pred_fallthru
    _
  // Predicated region
  $region22: #{_dnn_forward_jit.1} parent=0 // pred_check
    _
  $region23: #{_dnn_forward_jit.1} parent=0 // pred_check_branch
    %25 = sbr.rel (0) target = $region25
  $region24: #{_dnn_forward_jit.1} parent=0 // pred_region
    _
  $region25: #{_dnn_forward_jit.1} parent=0 // pred_fallthru
    _
  // Predicated region
  $region26: #{_dnn_forward_jit.1} parent=0 // pred_check
    _
  $region27: #{_dnn_forward_jit.1} parent=0 // pred_check_branch
    %27 = sbr.rel (0) target = $region29
  $region28: #{_dnn_forward_jit.1} parent=0 // pred_region
    _
  $region29: #{_dnn_forward_jit.1} parent=0 // pred_fallthru
    _
  // Predicated region
  $region30: #{_dnn_forward_jit.1} parent=0 // pred_check
    _
  $region31: #{_dnn_forward_jit.1} parent=0 // pred_check_branch
    %29 = sbr.rel (0) target = $region33
  $region32: #{_dnn_forward_jit.1} parent=0 // pred_region
    _
  $region33: #{_dnn_forward_jit.1} parent=0 // pred_fallthru
    _
  // Predicated region
  $region34: #{_dnn_forward_jit.1} parent=0 // pred_check
    _
  $region35: #{_dnn_forward_jit.1} parent=0 // pred_check_branch
    %31 = sbr.rel (0) target = $region37
  $region36: #{_dnn_forward_jit.1} parent=0 // pred_region
    _
  $region37: #{_dnn_forward_jit.1} parent=0 // pred_fallthru
    _
  %v32 = vld [vmem:[%s0] sm:$0x3]
  %v33 = vld [vmem:[%s1] sm:$0xff]
  %v34 = vld [vmem:[%s1 + $0x8] sm:$0xff]
  %v35 = vld [vmem:[%s1 + $0x10] sm:$0xff]
  %v36 = vld [vmem:[%s1 + $0x18] sm:$0xff]
  %v37 = vld [vmem:[%s2] sm:$0xff]
  %v38 = vld [vmem:[%s2 + $0x8] sm:$0xff]
  %v39 = vld [vmem:[%s2 + $0x10] sm:$0xff]
  %v40 = vld [vmem:[%s2 + $0x18] sm:$0xff]
  %42 = vset.pattern.permute.xlu0 0
  %43 = vperm.xlu0 %42, %v37
  %v44 = vpop.permute.xlu0 %43
  %47 = vset.pattern.permute.xlu0 0
  %48 = vperm.xlu0 %47, %v38
  %v49 = vpop.permute.xlu0 %48
  %52 = vset.pattern.permute.xlu0 0
  %53 = vperm.xlu0 %52, %v39
  %v54 = vpop.permute.xlu0 %53
  %57 = vset.pattern.permute.xlu0 0
  %58 = vperm.xlu0 %57, %v40
  %v59 = vpop.permute.xlu0 %58
  %62 = vset.pattern.permute.xlu0 0
  %63 = vperm.xlu0 %62, %v33
  %v64 = vpop.permute.xlu0 %63
  %67 = vset.pattern.permute.xlu0 0
  %68 = vperm.xlu0 %67, %v34
  %v69 = vpop.permute.xlu0 %68
  %72 = vset.pattern.permute.xlu0 0
  %73 = vperm.xlu0 %72, %v35
  %v74 = vpop.permute.xlu0 %73
  %77 = vset.pattern.permute.xlu0 0
  %78 = vperm.xlu0 %77, %v36
  %v79 = vpop.permute.xlu0 %78
  %v81 = vperm.slane %v32, 0
  %v82 = vmul.f32 %v64, %v81
  %v83 = vmul.f32 %v69, %v81
  %v84 = vmul.f32 %v74, %v81
  %v85 = vmul.f32 %v79, %v81
  %v86 = vadd.f32 %v44, %v82
  %v87 = vadd.f32 %v49, %v83
  %v88 = vadd.f32 %v54, %v84
  %v89 = vadd.f32 %v59, %v85
  %90 = vset.pattern.permute.xlu0 1
  %91 = vperm.xlu0 %90, %v33
  %v92 = vpop.permute.xlu0 %91
  %94 = vset.pattern.permute.xlu0 1
  %95 = vperm.xlu0 %94, %v34
  %v96 = vpop.permute.xlu0 %95
  %98 = vset.pattern.permute.xlu0 1
  %99 = vperm.xlu0 %98, %v35
  %v100 = vpop.permute.xlu0 %99
  %102 = vset.pattern.permute.xlu0 1
  %103 = vperm.xlu0 %102, %v36
  %v104 = vpop.permute.xlu0 %103
  %v106 = vperm.slane %v32, 1
  %v107 = vmul.f32 %v92, %v106
  %v108 = vmul.f32 %v96, %v106
  %v109 = vmul.f32 %v100, %v106
  %v110 = vmul.f32 %v104, %v106
  %v111 = vadd.f32 %v86, %v107
  %v112 = vadd.f32 %v87, %v108
  %v113 = vadd.f32 %v88, %v109
  %v114 = vadd.f32 %v89, %v110
  %v115 = vxor.u32 %v111, 2147483648
  %v116 = vxor.u32 %v112, 2147483648
  %v117 = vxor.u32 %v113, 2147483648
  %v118 = vxor.u32 %v114, 2147483648
  %v119 = vmul.f32 %v115, 1.442695
  %v120 = vpow.pop %v119
  %v121 = vmul.f32 %v116, 1.442695
  %v122 = vpow.pop %v121
  %v123 = vmul.f32 %v117, 1.442695
  %v124 = vpow.pop %v123
  %v125 = vmul.f32 %v118, 1.442695
  %v126 = vpow.pop %v125
  %v127 = vadd.f32 %v120, 1.0
  %v128 = vadd.f32 %v122, 1.0
  %v129 = vadd.f32 %v124, 1.0
  %v130 = vadd.f32 %v126, 1.0
  %v131 = vrcp.pop %v127
  %v132 = vmul.f32 %v127, %v131
  %v133 = vsub.f32 1.0, %v132
  %v134 = vmul.f32 %v131, %v133
  %v135 = vadd.f32 %v131, %v134
  %vm136 = vweird.f32 %v127
  %vm137 = vweird.f32 %v131
  %vm138 = vmor %vm136, %vm137
  %v139 = vsel %vm138, %v131, %v135
  %v140 = vand.u32 2147483647, %v127
  %vm141 = vcmp.eq.f32.partialorder %v140, 8.507059e+37
  %v142 = vand.u32 %v127, 2147483648
  %v143 = vor.u32 1.1754944e-38, %v142
  %v144 = vsel %vm141, %v143, %v139
  %v145 = vmul.f32 1.0, %v144
  %v146 = vrcp.pop %v128
  %v147 = vmul.f32 %v128, %v146
  %v148 = vsub.f32 1.0, %v147
  %v149 = vmul.f32 %v146, %v148
  %v150 = vadd.f32 %v146, %v149
  %vm151 = vweird.f32 %v128
  %vm152 = vweird.f32 %v146
  %vm153 = vmor %vm151, %vm152
  %v154 = vsel %vm153, %v146, %v150
  %v155 = vand.u32 2147483647, %v128
  %vm156 = vcmp.eq.f32.partialorder %v155, 8.507059e+37
  %v157 = vand.u32 %v128, 2147483648
  %v158 = vor.u32 1.1754944e-38, %v157
  %v159 = vsel %vm156, %v158, %v154
  %v160 = vmul.f32 1.0, %v159
  %v161 = vrcp.pop %v129
  %v162 = vmul.f32 %v129, %v161
  %v163 = vsub.f32 1.0, %v162
  %v164 = vmul.f32 %v161, %v163
  %v165 = vadd.f32 %v161, %v164
  %vm166 = vweird.f32 %v129
  %vm167 = vweird.f32 %v161
  %vm168 = vmor %vm166, %vm167
  %v169 = vsel %vm168, %v161, %v165
  %v170 = vand.u32 2147483647, %v129
  %vm171 = vcmp.eq.f32.partialorder %v170, 8.507059e+37
  %v172 = vand.u32 %v129, 2147483648
  %v173 = vor.u32 1.1754944e-38, %v172
  %v174 = vsel %vm171, %v173, %v169
  %v175 = vmul.f32 1.0, %v174
  %v176 = vrcp.pop %v130
  %v177 = vmul.f32 %v130, %v176
  %v178 = vsub.f32 1.0, %v177
  %v179 = vmul.f32 %v176, %v178
  %v180 = vadd.f32 %v176, %v179
  %vm181 = vweird.f32 %v130
  %vm182 = vweird.f32 %v176
  %vm183 = vmor %vm181, %vm182
  %v184 = vsel %vm183, %v176, %v180
  %v185 = vand.u32 2147483647, %v130
  %vm186 = vcmp.eq.f32.partialorder %v185, 8.507059e+37
  %v187 = vand.u32 %v130, 2147483648
  %v188 = vor.u32 1.1754944e-38, %v187
  %v189 = vsel %vm186, %v188, %v184
  %v190 = vmul.f32 1.0, %v189
  %v191 = vmul.f32 %v111, %v145
  %v192 = vmul.f32 %v112, %v160
  %v193 = vmul.f32 %v113, %v175
  %v194 = vmul.f32 %v114, %v190
  %v195 = vld [vmem:[%s3] sm:$0xff]
  %v196 = vld [vmem:[%s3 + $0x8] sm:$0xff]
  %v197 = vld [vmem:[%s3 + $0x10] sm:$0xff]
  %v198 = vld [vmem:[%s3 + $0x18] sm:$0xff]
  %v199 = vld [vmem:[%s4] sm:$0xff]
  %v200 = vld [vmem:[%s4 + $0x8] sm:$0xff]
  %v201 = vld [vmem:[%s4 + $0x10] sm:$0xff]
  %v202 = vld [vmem:[%s4 + $0x18] sm:$0xff]
  %204 = vset.pattern.permute.xlu0 0
  %205 = vperm.xlu0 %204, %v199
  %v206 = vpop.permute.xlu0 %205
  %209 = vset.pattern.permute.xlu0 0
  %210 = vperm.xlu0 %209, %v200
  %v211 = vpop.permute.xlu0 %210
  %214 = vset.pattern.permute.xlu0 0
  %215 = vperm.xlu0 %214, %v201
  %v216 = vpop.permute.xlu0 %215
  %219 = vset.pattern.permute.xlu0 0
  %220 = vperm.xlu0 %219, %v202
  %v221 = vpop.permute.xlu0 %220
  %vm223 = vcmask 261120
  %v225 = vsel %vm223, %v195, 0
  %v228 = vsel %vm223, %v196, 0
  %v231 = vsel %vm223, %v197, 0
  %v234 = vsel %vm223, %v198, 0
  %236 = vmatpush.msra.mxu0 0.0
  %237 = vmatpush.msra.mxu0 0.0
  %238 = vmatpush.msra.mxu0 0.0
  %239 = vmatpush.msra.mxu0 0.0
  %240 = vmatpush.msra.mxu0 0.0
  %241 = vmatpush.msra.mxu0 0.0
  %242 = vmatpush.msra.mxu0 0.0
  %243 = vmatpush.msra.mxu0 0.0
  %244 = vmatpush.msra.mxu0 0.0
  %245 = vmatpush.msra.mxu0 0.0
  %246 = vmatpush.msra.mxu0 0.0
  %247 = vmatpush.msra.mxu0 0.0
  %248 = vmatpush.msra.mxu0 %v194
  %249 = vmatpush.msra.mxu0 %v193
  %250 = vmatpush.msra.mxu0 %v192
  %251 = vmatpush.msra.mxu0 %v191
  %252 = vmatmul.f32.gmra.mxu0 %v225
  %v253 = vpop.f32.mrf.mxu0
  %v254 = vadd.f32 %v206, %v253
  %255 = vmatmul.f32.gmra.mxu0 %v228
  %v256 = vpop.f32.mrf.mxu0
  %v257 = vadd.f32 %v211, %v256
  %258 = vmatmul.f32.gmra.mxu0 %v231
  %v259 = vpop.f32.mrf.mxu0
  %v260 = vadd.f32 %v216, %v259
  %261 = vmatmul.f32.gmra.mxu0 %v234
  %v262 = vpop.f32.mrf.mxu0
  %v263 = vadd.f32 %v221, %v262
  %264 = vdwg.mxu0
  %v265 = vxor.u32 %v254, 2147483648
  %v266 = vxor.u32 %v257, 2147483648
  %v267 = vxor.u32 %v260, 2147483648
  %v268 = vxor.u32 %v263, 2147483648
  %v269 = vmul.f32 %v265, 1.442695
  %v270 = vpow.pop %v269
  %v271 = vmul.f32 %v266, 1.442695
  %v272 = vpow.pop %v271
  %v273 = vmul.f32 %v267, 1.442695
  %v274 = vpow.pop %v273
  %v275 = vmul.f32 %v268, 1.442695
  %v276 = vpow.pop %v275
  %v277 = vadd.f32 %v270, 1.0
  %v278 = vadd.f32 %v272, 1.0
  %v279 = vadd.f32 %v274, 1.0
  %v280 = vadd.f32 %v276, 1.0
  %v281 = vrcp.pop %v277
  %v282 = vmul.f32 %v277, %v281
  %v283 = vsub.f32 1.0, %v282
  %v284 = vmul.f32 %v281, %v283
  %v285 = vadd.f32 %v281, %v284
  %vm286 = vweird.f32 %v277
  %vm287 = vweird.f32 %v281
  %vm288 = vmor %vm286, %vm287
  %v289 = vsel %vm288, %v281, %v285
  %v290 = vand.u32 2147483647, %v277
  %vm291 = vcmp.eq.f32.partialorder %v290, 8.507059e+37
  %v292 = vand.u32 %v277, 2147483648
  %v293 = vor.u32 1.1754944e-38, %v292
  %v294 = vsel %vm291, %v293, %v289
  %v295 = vmul.f32 1.0, %v294
  %v296 = vrcp.pop %v278
  %v297 = vmul.f32 %v278, %v296
  %v298 = vsub.f32 1.0, %v297
  %v299 = vmul.f32 %v296, %v298
  %v300 = vadd.f32 %v296, %v299
  %vm301 = vweird.f32 %v278
  %vm302 = vweird.f32 %v296
  %vm303 = vmor %vm301, %vm302
  %v304 = vsel %vm303, %v296, %v300
  %v305 = vand.u32 2147483647, %v278
  %vm306 = vcmp.eq.f32.partialorder %v305, 8.507059e+37
  %v307 = vand.u32 %v278, 2147483648
  %v308 = vor.u32 1.1754944e-38, %v307
  %v309 = vsel %vm306, %v308, %v304
  %v310 = vmul.f32 1.0, %v309
  %v311 = vrcp.pop %v279
  %v312 = vmul.f32 %v279, %v311
  %v313 = vsub.f32 1.0, %v312
  %v314 = vmul.f32 %v311, %v313
  %v315 = vadd.f32 %v311, %v314
  %vm316 = vweird.f32 %v279
  %vm317 = vweird.f32 %v311
  %vm318 = vmor %vm316, %vm317
  %v319 = vsel %vm318, %v311, %v315
  %v320 = vand.u32 2147483647, %v279
  %vm321 = vcmp.eq.f32.partialorder %v320, 8.507059e+37
  %v322 = vand.u32 %v279, 2147483648
  %v323 = vor.u32 1.1754944e-38, %v322
  %v324 = vsel %vm321, %v323, %v319
  %v325 = vmul.f32 1.0, %v324
  %v326 = vrcp.pop %v280
  %v327 = vmul.f32 %v280, %v326
  %v328 = vsub.f32 1.0, %v327
  %v329 = vmul.f32 %v326, %v328
  %v330 = vadd.f32 %v326, %v329
  %vm331 = vweird.f32 %v280
  %vm332 = vweird.f32 %v326
  %vm333 = vmor %vm331, %vm332
  %v334 = vsel %vm333, %v326, %v330
  %v335 = vand.u32 2147483647, %v280
  %vm336 = vcmp.eq.f32.partialorder %v335, 8.507059e+37
  %v337 = vand.u32 %v280, 2147483648
  %v338 = vor.u32 1.1754944e-38, %v337
  %v339 = vsel %vm336, %v338, %v334
  %v340 = vmul.f32 1.0, %v339
  %v341 = vmul.f32 %v254, %v295
  %v342 = vmul.f32 %v257, %v310
  %v343 = vmul.f32 %v260, %v325
  %v344 = vmul.f32 %v263, %v340
  %v345 = vld [vmem:[%s5] sm:$0xff]
  %v346 = vld [vmem:[%s5 + $0x8] sm:$0xff]
  %v347 = vld [vmem:[%s5 + $0x10] sm:$0xff]
  %v348 = vld [vmem:[%s5 + $0x18] sm:$0xff]
  %v349 = vld [vmem:[%s6] sm:$0xff]
  %v350 = vld [vmem:[%s6 + $0x8] sm:$0xff]
  %v351 = vld [vmem:[%s6 + $0x10] sm:$0xff]
  %v352 = vld [vmem:[%s6 + $0x18] sm:$0xff]
  %354 = vset.pattern.permute.xlu0 0
  %355 = vperm.xlu0 %354, %v349
  %v356 = vpop.permute.xlu0 %355
  %359 = vset.pattern.permute.xlu0 0
  %360 = vperm.xlu0 %359, %v350
  %v361 = vpop.permute.xlu0 %360
  %364 = vset.pattern.permute.xlu0 0
  %365 = vperm.xlu0 %364, %v351
  %v366 = vpop.permute.xlu0 %365
  %369 = vset.pattern.permute.xlu0 0
  %370 = vperm.xlu0 %369, %v352
  %v371 = vpop.permute.xlu0 %370
  %v374 = vsel %vm223, %v345, 0
  %v377 = vsel %vm223, %v346, 0
  %v380 = vsel %vm223, %v347, 0
  %v383 = vsel %vm223, %v348, 0
  %385 = vmatpush.msra.mxu0 0.0
  %386 = vmatpush.msra.mxu0 0.0
  %387 = vmatpush.msra.mxu0 0.0
  %388 = vmatpush.msra.mxu0 0.0
  %389 = vmatpush.msra.mxu0 0.0
  %390 = vmatpush.msra.mxu0 0.0
  %391 = vmatpush.msra.mxu0 0.0
  %392 = vmatpush.msra.mxu0 0.0
  %393 = vmatpush.msra.mxu0 0.0
  %394 = vmatpush.msra.mxu0 0.0
  %395 = vmatpush.msra.mxu0 0.0
  %396 = vmatpush.msra.mxu0 0.0
  %397 = vmatpush.msra.mxu0 %v344
  %398 = vmatpush.msra.mxu0 %v343
  %399 = vmatpush.msra.mxu0 %v342
  %400 = vmatpush.msra.mxu0 %v341
  %401 = vmatmul.f32.gmra.mxu0 %v374
  %v402 = vpop.f32.mrf.mxu0
  %v403 = vadd.f32 %v356, %v402
  %404 = vmatmul.f32.gmra.mxu0 %v377
  %v405 = vpop.f32.mrf.mxu0
  %v406 = vadd.f32 %v361, %v405
  %407 = vmatmul.f32.gmra.mxu0 %v380
  %v408 = vpop.f32.mrf.mxu0
  %v409 = vadd.f32 %v366, %v408
  %410 = vmatmul.f32.gmra.mxu0 %v383
  %v411 = vpop.f32.mrf.mxu0
  %v412 = vadd.f32 %v371, %v411
  %413 = vdwg.mxu0
  %v414 = vxor.u32 %v403, 2147483648
  %v415 = vxor.u32 %v406, 2147483648
  %v416 = vxor.u32 %v409, 2147483648
  %v417 = vxor.u32 %v412, 2147483648
  %v418 = vmul.f32 %v414, 1.442695
  %v419 = vpow.pop %v418
  %v420 = vmul.f32 %v415, 1.442695
  %v421 = vpow.pop %v420
  %v422 = vmul.f32 %v416, 1.442695
  %v423 = vpow.pop %v422
  %v424 = vmul.f32 %v417, 1.442695
  %v425 = vpow.pop %v424
  %v426 = vadd.f32 %v419, 1.0
  %v427 = vadd.f32 %v421, 1.0
  %v428 = vadd.f32 %v423, 1.0
  %v429 = vadd.f32 %v425, 1.0
  %v430 = vrcp.pop %v426
  %v431 = vmul.f32 %v426, %v430
  %v432 = vsub.f32 1.0, %v431
  %v433 = vmul.f32 %v430, %v432
  %v434 = vadd.f32 %v430, %v433
  %vm435 = vweird.f32 %v426
  %vm436 = vweird.f32 %v430
  %vm437 = vmor %vm435, %vm436
  %v438 = vsel %vm437, %v430, %v434
  %v439 = vand.u32 2147483647, %v426
  %vm440 = vcmp.eq.f32.partialorder %v439, 8.507059e+37
  %v441 = vand.u32 %v426, 2147483648
  %v442 = vor.u32 1.1754944e-38, %v441
  %v443 = vsel %vm440, %v442, %v438
  %v444 = vmul.f32 1.0, %v443
  %v445 = vrcp.pop %v427
  %v446 = vmul.f32 %v427, %v445
  %v447 = vsub.f32 1.0, %v446
  %v448 = vmul.f32 %v445, %v447
  %v449 = vadd.f32 %v445, %v448
  %vm450 = vweird.f32 %v427
  %vm451 = vweird.f32 %v445
  %vm452 = vmor %vm450, %vm451
  %v453 = vsel %vm452, %v445, %v449
  %v454 = vand.u32 2147483647, %v427
  %vm455 = vcmp.eq.f32.partialorder %v454, 8.507059e+37
  %v456 = vand.u32 %v427, 2147483648
  %v457 = vor.u32 1.1754944e-38, %v456
  %v458 = vsel %vm455, %v457, %v453
  %v459 = vmul.f32 1.0, %v458
  %v460 = vrcp.pop %v428
  %v461 = vmul.f32 %v428, %v460
  %v462 = vsub.f32 1.0, %v461
  %v463 = vmul.f32 %v460, %v462
  %v464 = vadd.f32 %v460, %v463
  %vm465 = vweird.f32 %v428
  %vm466 = vweird.f32 %v460
  %vm467 = vmor %vm465, %vm466
  %v468 = vsel %vm467, %v460, %v464
  %v469 = vand.u32 2147483647, %v428
  %vm470 = vcmp.eq.f32.partialorder %v469, 8.507059e+37
  %v471 = vand.u32 %v428, 2147483648
  %v472 = vor.u32 1.1754944e-38, %v471
  %v473 = vsel %vm470, %v472, %v468
  %v474 = vmul.f32 1.0, %v473
  %v475 = vrcp.pop %v429
  %v476 = vmul.f32 %v429, %v475
  %v477 = vsub.f32 1.0, %v476
  %v478 = vmul.f32 %v475, %v477
  %v479 = vadd.f32 %v475, %v478
  %vm480 = vweird.f32 %v429
  %vm481 = vweird.f32 %v475
  %vm482 = vmor %vm480, %vm481
  %v483 = vsel %vm482, %v475, %v479
  %v484 = vand.u32 2147483647, %v429
  %vm485 = vcmp.eq.f32.partialorder %v484, 8.507059e+37
  %v486 = vand.u32 %v429, 2147483648
  %v487 = vor.u32 1.1754944e-38, %v486
  %v488 = vsel %vm485, %v487, %v483
  %v489 = vmul.f32 1.0, %v488
  %v490 = vmul.f32 %v403, %v444
  %v491 = vmul.f32 %v406, %v459
  %v492 = vmul.f32 %v409, %v474
  %v493 = vmul.f32 %v412, %v489
  %v494 = vld [vmem:[%s7] sm:$0x7]
  %v495 = vld [vmem:[%s8] sm:$0x7]
  %497 = vset.pattern.permute.xlu0 0
  %498 = vperm.xlu0 %497, %v495
  %v499 = vpop.permute.xlu0 %498
  %v502 = vsel %vm223, %v494, 0
  %504 = vmatpush.msra.mxu0 0.0
  %505 = vmatpush.msra.mxu0 0.0
  %506 = vmatpush.msra.mxu0 0.0
  %507 = vmatpush.msra.mxu0 0.0
  %508 = vmatpush.msra.mxu0 0.0
  %509 = vmatpush.msra.mxu0 0.0
  %510 = vmatpush.msra.mxu0 0.0
  %511 = vmatpush.msra.mxu0 0.0
  %512 = vmatpush.msra.mxu0 0.0
  %513 = vmatpush.msra.mxu0 0.0
  %514 = vmatpush.msra.mxu0 0.0
  %515 = vmatpush.msra.mxu0 0.0
  %516 = vmatpush.msra.mxu0 %v493
  %517 = vmatpush.msra.mxu0 %v492
  %518 = vmatpush.msra.mxu0 %v491
  %519 = vmatpush.msra.mxu0 %v490
  %520 = vmatmul.f32.gmra.mxu0 %v502
  %v521 = vpop.f32.mrf.mxu0
  %v522 = vadd.f32 %v499, %v521
  %523 = vdwg.mxu0
  %524 = vst [vmem:[%s9] sm:$0x7] %v522
  // Predicated region
  $region38: #{_dnn_forward_jit.1} parent=0 // pred_check
    _
  $region39: #{_dnn_forward_jit.1} parent=0 // pred_check_branch
    %526 = sbr.rel (0) target = $region41
  $region40: #{_dnn_forward_jit.1} parent=0 // pred_region
    _
  $region41: #{_dnn_forward_jit.1} parent=0 // pred_fallthru
    _
  // Predicated region
  $region42: #{_dnn_forward_jit.1} parent=0 // pred_check
    _
  $region43: #{_dnn_forward_jit.1} parent=0 // pred_check_branch
    %528 = sbr.rel (0) target = $region45
  $region44: #{_dnn_forward_jit.1} parent=0 // pred_region
    _
  $region45: #{_dnn_forward_jit.1} parent=0 // pred_fallthru
    _

</llo_original>
